<compile_context>
chip_gen: v7x
topology: tpu7x:2x2x1
jax: 0.10.0
libtpu: 0.0.40
codegen_flags: <defaults>
</compile_context>

<pallas_src>
import numpy as np

import jax
import jax.numpy as jnp
from jax.experimental import pallas as pl
from jax.experimental.pallas import tpu as pltpu


def _round_up(x, m):
    return -(-x // m) * m


# ----------------------------- kernels ---------------------------------------
def _make_fast_kernel(G, H, W):
    """4-byte dtypes: batched lane-interleave matmuls + sublane-strided stores."""

    def kernel(x_ref, e_ref, o_ref):
        # x_ref: (G, 2, 2, H, W)  indexed (group, a=row parity, b=col parity, h, w)
        # e_ref: (2, W, 2W)       lane-interleave matrices  E[b, w, 2w+b] = 1
        # o_ref: (G, 2H, 2W)
        e0 = e_ref[0]
        e1 = e_ref[1]
        for a in (0, 1):  # static 2x unroll over output-row parity
            # Lane (W) interleave for all G groups in one pair of big dots:
            #   y[(g, h), 2w + b] = x[g, a, b, h, w]
            # (reshape is relayout-free: wrapper enforces G == 1 or H % 8 == 0)
            x0 = x_ref[:, a, 0].reshape(G * H, W)
            x1 = x_ref[:, a, 1].reshape(G * H, W)
            y = (jnp.dot(x0, e0, preferred_element_type=jnp.float32)
                 + jnp.dot(x1, e1, preferred_element_type=jnp.float32))
            y = y.reshape(G, H, 2 * W).astype(o_ref.dtype)
            # Row (H) interleave with zero MXU work: sublane-strided store
            #   out[g, 2h + a, :] = y[g, h, :]
            o_ref[:, pl.ds(a, H, stride=2), :] = y

    return kernel


def _make_bf16_kernel(H, W):
    """Sub-32-bit dtypes: exact 0/1-matmul row interleave (see header note)."""

    def kernel(x_ref, e_ref, r_ref, o_ref):
        # x_ref: (1, 2, 2, H, W); e_ref: (2, W, 2W); r_ref: (2, 2H, H)
        # o_ref: (1, 2H, 2W)
        e0, e1 = e_ref[0], e_ref[1]
        r0, r1 = r_ref[0], r_ref[1]

        def lane(a):
            y = (jnp.dot(x_ref[0, a, 0], e0, preferred_element_type=jnp.float32)
                 + jnp.dot(x_ref[0, a, 1], e1, preferred_element_type=jnp.float32))
            # Exact: every element of y is a single 1*x copy of an input value,
            # and compute dtype == data dtype (no silent rounding of f32 data).
            return y.astype(r0.dtype)

        out = (jnp.dot(r0, lane(0), preferred_element_type=jnp.float32)
               + jnp.dot(r1, lane(1), preferred_element_type=jnp.float32))
        o_ref[0] = out.astype(o_ref.dtype)

    return kernel


# ----------------------------- block sizing ----------------------------------
def _pick_groups_per_block(num_groups, H, W, itemsize, e_vmem_bytes):
    """How many (2, 2, H, W) channel groups each grid step processes."""
    sub = 32 // itemsize                       # sublane-tile rows for this dtype
    # Padded VMEM footprint of one group's input + output blocks (x2: double buffer).
    in_vmem = 4 * _round_up(H, sub) * _round_up(W, 128) * itemsize
    out_vmem = _round_up(2 * H, sub) * _round_up(2 * W, 128) * itemsize
    per_group_vmem = 2 * (in_vmem + out_vmem)
    vmem_budget = 10 * 1024 * 1024 - e_vmem_bytes   # well under every scoped default
    hbm_per_group = 4 * H * W * itemsize
    hbm_cap = 2 * 1024 * 1024                       # ~1-2 MiB input per grid step

    divisors = [d for d in range(1, num_groups + 1) if num_groups % d == 0]

    def feasible(g, min_steps):
        return (num_groups // g >= min(min_steps, num_groups)
                and g * per_group_vmem <= vmem_budget
                and g * hbm_per_group <= hbm_cap)

    # Prefer >= 8 grid steps (v7x: 2 TensorCores x software pipelining); fold
    # further (down to 4 steps) only if blocks would otherwise stay < ~1 MiB.
    best = max([g for g in divisors if feasible(g, 8)], default=1)
    if best * hbm_per_group < (1 << 20):
        best = max([g for g in divisors if feasible(g, 4)] + [best])
    return best


# ----------------------------- wrapper ----------------------------------------
def squeeze_forward(z):
    """Forward pass of the `Squeeze` flow. Returns (z_out, log_det)."""
    N, C, H, W = z.shape
    if C % 4 != 0:
        raise ValueError("Squeeze forward requires C to be a multiple of 4.")
    C4 = C // 4
    out_dtype = z.dtype

    if z.dtype == jnp.bfloat16:
        cdtype = jnp.dtype(jnp.bfloat16)
        fast = False
    else:
        cdtype = jnp.dtype(jnp.float32)
        fast = True
        if z.dtype != cdtype:
            # Exact for half-precision / small-int values; avoids mixed-dtype dots.
            z = z.astype(cdtype)

    itemsize = cdtype.itemsize
    sub = 32 // itemsize

    # (N, C, H, W) -> (num_groups, 2, 2, H, W): contiguous reshape, free.
    num_groups = N * C4
    zg = z.reshape(num_groups, 2, 2, H, W)

    # Lane-interleave matrices E[b, w, 2w+b] = 1, built once on the host and
    # kept resident in VMEM (constant block index -> DMA'd a single time).
    w_idx = np.arange(W)
    E = np.zeros((2, W, 2 * W), dtype=np.float32)
    E[0, w_idx, 2 * w_idx] = 1.0
    E[1, w_idx, 2 * w_idx + 1] = 1.0
    E = jnp.asarray(E, dtype=cdtype)
    e_vmem = 2 * _round_up(W, sub) * _round_up(2 * W, 128) * itemsize

    if fast:
        # G > 1 only when the in-kernel (G, H, W) -> (G*H, W) merge is
        # relayout-free (H multiple of the sublane tile); otherwise G = 1
        # keeps the reshape a trivial leading-unit-dim squeeze.
        G = (_pick_groups_per_block(num_groups, H, W, itemsize, e_vmem)
             if H % sub == 0 else 1)
        kernel = _make_fast_kernel(G, H, W)
        operands = (zg, E)
        in_specs = [
            pl.BlockSpec((G, 2, 2, H, W), lambda i: (i, 0, 0, 0, 0)),
            pl.BlockSpec((2, W, 2 * W), lambda i: (0, 0, 0)),
        ]
    else:
        # bf16 fallback: per-group blocks, row interleave via 0/1 matmuls.
        G = 1
        h_idx = np.arange(H)
        R = np.zeros((2, 2 * H, H), dtype=np.float32)
        R[0, 2 * h_idx, h_idx] = 1.0
        R[1, 2 * h_idx + 1, h_idx] = 1.0
        R = jnp.asarray(R, dtype=cdtype)
        kernel = _make_bf16_kernel(H, W)
        operands = (zg, E, R)
        in_specs = [
            pl.BlockSpec((1, 2, 2, H, W), lambda i: (i, 0, 0, 0, 0)),
            pl.BlockSpec((2, W, 2 * W), lambda i: (0, 0, 0)),
            pl.BlockSpec((2, 2 * H, H), lambda i: (0, 0, 0)),
        ]

    out = pl.pallas_call(
        kernel,
        out_shape=jax.ShapeDtypeStruct((num_groups, 2 * H, 2 * W), cdtype),
        grid_spec=pltpu.PrefetchScalarGridSpec(
            num_scalar_prefetch=0,
            grid=(num_groups // G,),
            in_specs=in_specs,
            out_specs=pl.BlockSpec((G, 2 * H, 2 * W), lambda i: (i, 0, 0)),
        ),
        compiler_params=pltpu.CompilerParams(
            dimension_semantics=("parallel",),
            vmem_limit_bytes=32 * 1024 * 1024,
        ),
    )(*operands)

    log_det = 0
    # (num_groups, 2H, 2W) -> (N, C4, 2H, 2W): contiguous reshape, free.
    out = out.reshape(N, C4, 2 * H, 2 * W)
    if out.dtype != out_dtype:
        out = out.astype(out_dtype)
    return out, log_det


# ------------------------------ numpy reference ------------------------------
def _squeeze_ref(zn):
    n, c, h, w = zn.shape
    x = zn.reshape(n, c // 4, 2, 2, h, w)
    x = np.transpose(x, (0, 1, 4, 2, 5, 3))
    return x.reshape(n, c // 4, 2 * h, 2 * w)


if __name__ == "__main__":
    key = jax.random.PRNGKey(0)
    z = jax.random.normal(key, (2, 4, 16, 16), dtype=jnp.float32)

    out, log_det = squeeze_forward(z)
    out = jax.block_until_ready(out)
    assert out.shape == (2, 1, 32, 32)
    assert log_det == 0
    np.testing.assert_allclose(np.asarray(out), _squeeze_ref(np.asarray(z)),
                               rtol=1e-6, atol=1e-6)

    # Non-square spatial dims + several channel groups.
    z2 = jax.random.normal(jax.random.PRNGKey(1), (2, 8, 8, 16), dtype=jnp.float32)
    out2, _ = squeeze_forward(z2)
    out2 = jax.block_until_ready(out2)
    np.testing.assert_allclose(np.asarray(out2), _squeeze_ref(np.asarray(z2)),
                               rtol=1e-6, atol=1e-6)

    # Enough channel groups to exercise the batched (G > 1) fast path.
    z3 = jax.random.normal(jax.random.PRNGKey(2), (4, 16, 16, 16), dtype=jnp.float32)
    out3, _ = squeeze_forward(z3)
    out3 = jax.block_until_ready(out3)
    np.testing.assert_allclose(np.asarray(out3), _squeeze_ref(np.asarray(z3)),
                               rtol=1e-6, atol=1e-6)

    print("KERNEL_OK")
</pallas_src>

<mosaic_0001>
module attributes {stable_mosaic.version = 11 : i64} {
  func.func @kernel(%arg0: i32, %arg1: memref<1x2x2x16x16xf32, #tpu.memory_space<vmem>>, %arg2: memref<2x16x32xf32, #tpu.memory_space<vmem>>, %arg3: memref<1x32x32xf32, #tpu.memory_space<vmem>>) attributes {dimension_semantics = [#tpu.dimension_semantics<parallel>], iteration_bounds = array<i64: 2>, scalar_prefetch = 0 : i64, scratch_operands = 0 : i64, tpu.core_type = #tpu.core_type<tc>, window_params = [{transform_indices = @transform_0, window_bounds = array<i64: 1, 2, 2, 16, 16>}, {pipeline_mode = #tpu.pipeline_mode<synchronous>, transform_indices = @transform_1, window_bounds = array<i64: 2, 16, 32>}, {transform_indices = @transform_2, window_bounds = array<i64: 1, 32, 32>}]} {
    %c0 = arith.constant 0 : index
    %c0_0 = arith.constant 0 : index
    %c0_1 = arith.constant 0 : index
    %0 = vector.load %arg2[%c0, %c0_0, %c0_1] : memref<2x16x32xf32, #tpu.memory_space<vmem>>, vector<1x16x32xf32>
    %1 = vector.shape_cast %0 : vector<1x16x32xf32> to vector<16x32xf32>
    %c1 = arith.constant 1 : index
    %c0_2 = arith.constant 0 : index
    %c0_3 = arith.constant 0 : index
    %2 = vector.load %arg2[%c1, %c0_2, %c0_3] : memref<2x16x32xf32, #tpu.memory_space<vmem>>, vector<1x16x32xf32>
    %3 = vector.shape_cast %2 : vector<1x16x32xf32> to vector<16x32xf32>
    %c0_4 = arith.constant 0 : index
    %c0_5 = arith.constant 0 : index
    %c0_6 = arith.constant 0 : index
    %c0_7 = arith.constant 0 : index
    %c0_8 = arith.constant 0 : index
    %4 = vector.load %arg1[%c0_4, %c0_5, %c0_6, %c0_7, %c0_8] : memref<1x2x2x16x16xf32, #tpu.memory_space<vmem>>, vector<1x1x1x16x16xf32>
    %5 = vector.shape_cast %4 : vector<1x1x1x16x16xf32> to vector<1x16x16xf32>
    %6 = vector.shape_cast %5 : vector<1x16x16xf32> to vector<16x16xf32>
    %c0_9 = arith.constant 0 : index
    %c0_10 = arith.constant 0 : index
    %c1_11 = arith.constant 1 : index
    %c0_12 = arith.constant 0 : index
    %c0_13 = arith.constant 0 : index
    %7 = vector.load %arg1[%c0_9, %c0_10, %c1_11, %c0_12, %c0_13] : memref<1x2x2x16x16xf32, #tpu.memory_space<vmem>>, vector<1x1x1x16x16xf32>
    %8 = vector.shape_cast %7 : vector<1x1x1x16x16xf32> to vector<1x16x16xf32>
    %9 = vector.shape_cast %8 : vector<1x16x16xf32> to vector<16x16xf32>
    %cst = arith.constant dense<0.000000e+00> : vector<16x32xf32>
    %10 = tpu.matmul %6, %1, %cst {dimension_numbers = #tpu.dot_dimension_numbers<[1], [0], [0], [1], [0, 0, 1, 1], [], []>} : vector<16x16xf32>, vector<16x32xf32>, vector<16x32xf32> -> vector<16x32xf32>
    %cst_14 = arith.constant dense<0.000000e+00> : vector<16x32xf32>
    %11 = tpu.matmul %9, %3, %cst_14 {dimension_numbers = #tpu.dot_dimension_numbers<[1], [0], [0], [1], [0, 0, 1, 1], [], []>} : vector<16x16xf32>, vector<16x32xf32>, vector<16x32xf32> -> vector<16x32xf32>
    %12 = arith.addf %10, %11 : vector<16x32xf32>
    %13 = vector.shape_cast %12 : vector<16x32xf32> to vector<1x16x32xf32>
    %c0_15 = arith.constant 0 : index
    %c0_16 = arith.constant 0 : index
    %c0_17 = arith.constant 0 : index
    %14 = tpu.strided_load %arg3[%c0_15, %c0_16, %c0_17] {strides = array<i32: 1, 2, 1>} : memref<1x32x32xf32, #tpu.memory_space<vmem>>, vector<1x16x32xf32>
    tpu.strided_store %arg3[%c0_15, %c0_16, %c0_17], %13 {strides = array<i32: 1, 2, 1>} : memref<1x32x32xf32, #tpu.memory_space<vmem>>, vector<1x16x32xf32>
    %c0_18 = arith.constant 0 : index
    %c1_19 = arith.constant 1 : index
    %c0_20 = arith.constant 0 : index
    %c0_21 = arith.constant 0 : index
    %c0_22 = arith.constant 0 : index
    %15 = vector.load %arg1[%c0_18, %c1_19, %c0_20, %c0_21, %c0_22] : memref<1x2x2x16x16xf32, #tpu.memory_space<vmem>>, vector<1x1x1x16x16xf32>
    %16 = vector.shape_cast %15 : vector<1x1x1x16x16xf32> to vector<1x16x16xf32>
    %17 = vector.shape_cast %16 : vector<1x16x16xf32> to vector<16x16xf32>
    %c0_23 = arith.constant 0 : index
    %c1_24 = arith.constant 1 : index
    %c1_25 = arith.constant 1 : index
    %c0_26 = arith.constant 0 : index
    %c0_27 = arith.constant 0 : index
    %18 = vector.load %arg1[%c0_23, %c1_24, %c1_25, %c0_26, %c0_27] : memref<1x2x2x16x16xf32, #tpu.memory_space<vmem>>, vector<1x1x1x16x16xf32>
    %19 = vector.shape_cast %18 : vector<1x1x1x16x16xf32> to vector<1x16x16xf32>
    %20 = vector.shape_cast %19 : vector<1x16x16xf32> to vector<16x16xf32>
    %cst_28 = arith.constant dense<0.000000e+00> : vector<16x32xf32>
    %21 = tpu.matmul %17, %1, %cst_28 {dimension_numbers = #tpu.dot_dimension_numbers<[1], [0], [0], [1], [0, 0, 1, 1], [], []>} : vector<16x16xf32>, vector<16x32xf32>, vector<16x32xf32> -> vector<16x32xf32>
    %cst_29 = arith.constant dense<0.000000e+00> : vector<16x32xf32>
    %22 = tpu.matmul %20, %3, %cst_29 {dimension_numbers = #tpu.dot_dimension_numbers<[1], [0], [0], [1], [0, 0, 1, 1], [], []>} : vector<16x16xf32>, vector<16x32xf32>, vector<16x32xf32> -> vector<16x32xf32>
    %23 = arith.addf %21, %22 : vector<16x32xf32>
    %24 = vector.shape_cast %23 : vector<16x32xf32> to vector<1x16x32xf32>
    %c0_30 = arith.constant 0 : index
    %c1_31 = arith.constant 1 : index
    %c0_32 = arith.constant 0 : index
    %25 = tpu.strided_load %arg3[%c0_30, %c1_31, %c0_32] {strides = array<i32: 1, 2, 1>} : memref<1x32x32xf32, #tpu.memory_space<vmem>>, vector<1x16x32xf32>
    tpu.strided_store %arg3[%c0_30, %c1_31, %c0_32], %24 {strides = array<i32: 1, 2, 1>} : memref<1x32x32xf32, #tpu.memory_space<vmem>>, vector<1x16x32xf32>
    return
  }
  func.func @transform_0(%arg0: i32) -> (i32, i32, i32, i32, i32) {
    %c0_i32 = arith.constant 0 : i32
    %c0_i32_0 = arith.constant 0 : i32
    %c0_i32_1 = arith.constant 0 : i32
    %c0_i32_2 = arith.constant 0 : i32
    %c0_i32_3 = arith.constant 0 : i32
    return %arg0, %c0_i32, %c0_i32_0, %c0_i32_1, %c0_i32_2 : i32, i32, i32, i32, i32
  }
  func.func @transform_1(%arg0: i32) -> (i32, i32, i32) {
    %c0_i32 = arith.constant 0 : i32
    %c0_i32_0 = arith.constant 0 : i32
    %c0_i32_1 = arith.constant 0 : i32
    %c0_i32_2 = arith.constant 0 : i32
    return %c0_i32, %c0_i32_0, %c0_i32_1 : i32, i32, i32
  }
  func.func @transform_2(%arg0: i32) -> (i32, i32, i32) {
    %c0_i32 = arith.constant 0 : i32
    %c0_i32_0 = arith.constant 0 : i32
    %c0_i32_1 = arith.constant 0 : i32
    return %arg0, %c0_i32, %c0_i32_0 : i32, i32, i32
  }
}

</mosaic_0001>

<llo_original>
// kernel: tpu_custom_call.1
$region0: #{tpu_custom_call.1}
  #allocation0 [shape = 'u32[]', space=smem, size = 0x4, offset = 0x4, fixed_abs, tag = 'smem constant byte address 0x4 - core index']
  #allocation1 [shape = 'u32[144,128]{1,0:T(1,128)}', space=vmem, size = 0x12000, scoped, tag = 'internal scratch']
  %s0 = inlined_call_operand.hbm [shape: f32[2,2,2,16,16], index: 0, kind: input, shape index: {}]
  %s1 = inlined_call_operand.hbm [shape: f32[2,16,32], index: 1, kind: input, shape index: {}]
  %s2 = inlined_call_operand.hbm [shape: f32[2,32,32], index: 2, kind: output, shape index: {}]
  %s3 = sld [smem:[#allocation0]]
  $region49: #{tpu_custom_call.1} parent=0
    _
  %s5 = ssub.s32 1, %s3
  %s6 = scalar_select 0, %s5, %s3
  $region1: #{tpu_custom_call.1} parent=0
    #allocation2 [shape = 'u8[65536]{0}', space=vmem, size = 0x10000, scoped, tag = 'input window, operand 0']
    #allocation3 [shape = 's32[2]{0}', space=sflag, size = 0x8, scoped, tag = 'scoped memory for tpu_custom_call.1']
    #allocation4 [shape = 's32[2]{0}', space=sflag, size = 0x8, scoped, tag = 'scoped memory for tpu_custom_call.1']
    #allocation5 [shape = 'u8[16384]{0}', space=vmem, size = 0x4000, scoped, tag = 'input window, operand 1, single buffered']
    #allocation6 [shape = 's32[1]{0}', space=sflag, size = 0x4, scoped, tag = 'scoped memory for tpu_custom_call.1']
    #allocation7 [shape = 'u8[32768]{0}', space=vmem, size = 0x8000, scoped, tag = 'output window, operand 0']
    %7 = vsyncpa [#allocation3], 0
    %s8 = scalar_lea.sflag [#allocation3], 1
    %9 = vsyncpa %s8, 0
    %10 = vsyncpa [#allocation6], 0
    %11 = vsyncpa [#allocation4], 0
    %s12 = scalar_lea.sflag [#allocation4], 1
    %13 = vsyncpa %s12, 0
    loop: start=0, step=1, limit=4
    $region2: #{tpu_custom_call.1} parent=1 // loop_pre_header
      _
    $region3: #{tpu_custom_call.1} parent=1 // loop_header
      %s15 = sphi 0, %s19
      %p16 = scmp.ge.s32.totalorder %s15, 4
      %s25 = sphi 0, %s27
      %s28 = sphi 0, %s25
      %s29 = sphi 0, %s28
      %s45 = sphi 0, %s29
      %s49 = sphi 0, %s49
      %s51 = sphi 0, %s49
      %s52 = sphi 0, %s51
      %s66 = sphi 0, %s52
      %s72 = sphi 0, %s74
      %s75 = sphi 0, %s72
      %s76 = sphi 0, %s75
      %s92 = sphi 0, %s76
    $region4: #{tpu_custom_call.1} parent=1 // loop_header_branch
      %18 = sbr.rel (%p16) target = $region8
    $region5: #{tpu_custom_call.1} parent=1 // loop_body
      %s20 = ssub.s32 %s15, 1
      %s21 = ssub.s32 %s15, 2
      %s22 = sadd.s32 %s15, 1
      %s23 = ssub.s32 %s15, %s22
      %p24 = scmp.eq.s32.totalorder %s23, 0
      %s26 = sadd.s32 %s25, 1
      %s27 = scalar_select %p24, %s25, %s26
      %p30 = pneg %p24
      %p31 = scmp.eq.s32.totalorder %s15, 1
      %p32 = por %p30, %p31
      %p33 = scmp.ne.s32.totalorder %s25, %s28
      %p34 = scmp.eq.s32.totalorder %s15, 0
      %p35 = por %p33, %p34
      %p36 = scmp.ne.s32.totalorder %s25, %s28
      %p37 = scmp.eq.s32.totalorder %s20, 1
      %p38 = por %p36, %p37
      %p39 = scmp.ne.s32.totalorder %s28, %s29
      %p40 = scmp.eq.s32.totalorder %s20, 0
      %p41 = por %p39, %p40
      %p42 = scmp.ne.s32.totalorder %s28, %s29
      %p43 = scmp.eq.s32.totalorder %s21, 1
      %p44 = por %p42, %p43
      %p46 = scmp.ne.s32.totalorder %s29, %s45
      %p47 = scmp.eq.s32.totalorder %s21, 0
      %p48 = por %p46, %p47
      %s50 = sadd.s32 %s49, 1
      %p53 = scmp.eq.s32.totalorder %s15, 1
      %p54 = scmp.ne.s32.totalorder %s49, %s51
      %p55 = scmp.eq.s32.totalorder %s15, 0
      %p56 = por %p54, %p55
      %p57 = scmp.ne.s32.totalorder %s49, %s51
      %p58 = scmp.eq.s32.totalorder %s20, 1
      %p59 = por %p57, %p58
      %p60 = scmp.ne.s32.totalorder %s51, %s52
      %p61 = scmp.eq.s32.totalorder %s20, 0
      %p62 = por %p60, %p61
      %p63 = scmp.ne.s32.totalorder %s51, %s52
      %p64 = scmp.eq.s32.totalorder %s21, 1
      %p65 = por %p63, %p64
      %p67 = scmp.ne.s32.totalorder %s52, %s66
      %p68 = scmp.eq.s32.totalorder %s21, 0
      %p69 = por %p67, %p68
      %s70 = ssub.s32 %s15, %s22
      %p71 = scmp.eq.s32.totalorder %s70, 0
      %s73 = sadd.s32 %s72, 1
      %s74 = scalar_select %p71, %s72, %s73
      %p77 = pneg %p71
      %p78 = scmp.eq.s32.totalorder %s15, 1
      %p79 = por %p77, %p78
      %p80 = scmp.ne.s32.totalorder %s72, %s75
      %p81 = scmp.eq.s32.totalorder %s15, 0
      %p82 = por %p80, %p81
      %p83 = scmp.ne.s32.totalorder %s72, %s75
      %p84 = scmp.eq.s32.totalorder %s20, 1
      %p85 = por %p83, %p84
      %p86 = scmp.ne.s32.totalorder %s75, %s76
      %p87 = scmp.eq.s32.totalorder %s20, 0
      %p88 = por %p86, %p87
      %p89 = scmp.ne.s32.totalorder %s75, %s76
      %p90 = scmp.eq.s32.totalorder %s21, 1
      %p91 = por %p89, %p90
      %p93 = scmp.ne.s32.totalorder %s76, %s92
      %p94 = scmp.eq.s32.totalorder %s21, 0
      %p95 = por %p93, %p94
      %p96 = scmp.le.s32.totalorder 1, %s15
      %p97 = scmp.lt.s32.totalorder %s15, 3
      %p98 = pnand %p96, %p97
      %p99 = pneg %p98
      // Predicated region
      $region9: #{tpu_custom_call.1} parent=5 // pred_check
        _
      $region10: #{tpu_custom_call.1} parent=5 // pred_check_branch
        %101 = sbr.rel (%p98) target = $region12
      $region11: #{tpu_custom_call.1} parent=5 // pred_region
        %s102 = ssub.s32 %s15, 1
        // Predicated region
        $region13: #{tpu_custom_call.1} parent=11 // pred_check
          %p103 = pneg %p62
        $region14: #{tpu_custom_call.1} parent=11 // pred_check_branch
          %105 = sbr.rel (%p103) target = $region16
        $region15: #{tpu_custom_call.1} parent=11 // pred_region
          %s107 = ssub.s32 512, 512
          %108 = vsyncadd [#allocation6], %s107
          %s109 = sshll.u32 [#allocation5], 4
          %s110 = int_to_ptr.vmem [resolvable:$true] %s109
          %115 = dma.hbm_to_vmem [thread:$0]  %s1, 512, %s110, [#allocation6], 128, 128, 8
        $region16: #{tpu_custom_call.1} parent=11 // pred_fallthru
          _
      $region12: #{tpu_custom_call.1} parent=5 // pred_fallthru
        _
      %p116 = scmp.lt.s32.totalorder %s15, 2
      // Predicated region
      $region17: #{tpu_custom_call.1} parent=5 // pred_check
        %p117 = pneg %p116
      $region18: #{tpu_custom_call.1} parent=5 // pred_check_branch
        %119 = sbr.rel (%p117) target = $region20
      $region19: #{tpu_custom_call.1} parent=5 // pred_region
        // Predicated region
        $region21: #{tpu_custom_call.1} parent=19 // pred_check
          %p120 = pneg %p35
        $region22: #{tpu_custom_call.1} parent=19 // pred_check_branch
          %122 = sbr.rel (%p120) target = $region24
        $region23: #{tpu_custom_call.1} parent=19 // pred_region
          %s123 = sand.u32 %s25, 1
          %s124 = scalar_lea.sflag [#allocation3], %s123
          %s125 = sand.u32 %s25, 1
          %s126 = smul.addr %s125, 64
          %s127 = scalar_lea.vmem [#allocation2], %s126
          %s129 = ssub.s32 1024, 1024
          %130 = vsyncadd %s124, %s129
          %s131 = smul.addr %s15, 8
          %s132 = smul.addr %s131, 128
          %s133 = scalar_lea.hbm %s0, %s132
          %s134 = sshll.u32 %s127, 4
          %s135 = int_to_ptr.vmem [resolvable:$true] %s134
          %140 = dma.hbm_to_vmem [thread:$0]  %s133, 1024, %s135, %s124, 128, 128, 8
        $region24: #{tpu_custom_call.1} parent=19 // pred_fallthru
          _
      $region20: #{tpu_custom_call.1} parent=5 // pred_fallthru
        _
      %p141 = scmp.le.s32.totalorder 1, %s15
      %p142 = scmp.lt.s32.totalorder %s15, 3
      %p143 = pnand %p141, %p142
      %p144 = pneg %p143
      // Predicated region
      $region25: #{tpu_custom_call.1} parent=5 // pred_check
        _
      $region26: #{tpu_custom_call.1} parent=5 // pred_check_branch
        %146 = sbr.rel (%p143) target = $region28
      $region27: #{tpu_custom_call.1} parent=5 // pred_region
        %s147 = ssub.s32 %s15, 1
        %s148 = sand.u32 %s28, 1
        %s149 = scalar_lea.sflag [#allocation3], %s148
        %s150 = sand.u32 %s28, 1
        %s151 = smul.addr %s150, 64
        %s152 = scalar_lea.vmem [#allocation2], %s151
        // Predicated region
        $region29: #{tpu_custom_call.1} parent=27 // pred_check
          %p153 = pneg %p41
        $region30: #{tpu_custom_call.1} parent=27 // pred_check_branch
          %155 = sbr.rel (%p153) target = $region32
        $region31: #{tpu_custom_call.1} parent=27 // pred_region
          %156 = dma.done %s149, 1024
        $region32: #{tpu_custom_call.1} parent=27 // pred_fallthru
          _
        // Predicated region
        $region33: #{tpu_custom_call.1} parent=27 // pred_check
          %p157 = pneg %p62
        $region34: #{tpu_custom_call.1} parent=27 // pred_check_branch
          %159 = sbr.rel (%p157) target = $region36
        $region35: #{tpu_custom_call.1} parent=27 // pred_region
          %160 = dma.done [#allocation6], 512
        $region36: #{tpu_custom_call.1} parent=27 // pred_fallthru
          _
        %s161 = sand.u32 %s28, 1
        %s162 = scalar_lea.sflag [#allocation3], %s161
        %s163 = sand.u32 %s28, 1
        %s164 = smul.addr %s163, 64
        %s165 = scalar_lea.vmem [#allocation2], %s164
        %p166 = pneg %p41
        %p167 = pneg %p38
        %p168 = pneg %p62
        %p169 = pneg %p59
        %p170 = pneg %p88
        %p171 = pneg %p85
        %s172 = sand.u32 %s75, 1
        %s173 = scalar_lea.sflag [#allocation4], %s172
        %s174 = sand.u32 %s75, 1
        %s175 = smul.addr %s174, 32
        %s176 = scalar_lea.vmem [#allocation7], %s175
        %v177 = vld [vmem:[#allocation5] sm:$0xff]
        %v178 = vld [vmem:[#allocation5 + $0x8] sm:$0xff]
        %s179 = scalar_lea.vmem [#allocation5], 16
        %v180 = vld [vmem:[%s179] sm:$0xff]
        %v181 = vld [vmem:[%s179 + $0x8] sm:$0xff]
        %v182 = vld [vmem:[%s152] sm:$0xff]
        %v183 = vld [vmem:[%s152 + $0x8] sm:$0xff]
        %s184 = scalar_lea.vmem %s152, 16 [#allocation2]
        %v185 = vld [vmem:[%s184] sm:$0xff]
        %v186 = vld [vmem:[%s184 + $0x8] sm:$0xff]
        %vm187 = vcmask 130048
        %v189 = vsel %vm187, %v185, 0
        %v192 = vsel %vm187, %v186, 0
        %194 = vmatprep.subr.mxu0 0.0
        %195 = vmatpush1.msra.mxu0 %v180
        %196 = vmatprep.subr.mxu0 0.0
        %197 = vmatpush1.msra.mxu0 %v181
        %198 = vmatprep.subr.mxu0 0.0
        %199 = vmatpush1.msra.mxu0 0.0
        %200 = vmatprep.subr.mxu0 0.0
        %201 = vmatpush1.msra.mxu0 0.0
        %202 = vmatprep.subr.mxu0 0.0
        %203 = vmatpush1.msra.mxu0 0.0
        %204 = vmatprep.subr.mxu0 0.0
        %205 = vmatpush1.msra.mxu0 0.0
        %206 = vmatprep.subr.mxu0 0.0
        %207 = vmatpush1.msra.mxu0 0.0
        %208 = vmatprep.subr.mxu0 0.0
        %209 = vmatpush1.msra.mxu0 0.0
        %210 = vmatprep.subr.mxu0 0.0
        %211 = vmatpush1.msra.mxu0 0.0
        %212 = vmatprep.subr.mxu0 0.0
        %213 = vmatpush1.msra.mxu0 0.0
        %214 = vmatprep.subr.mxu0 0.0
        %215 = vmatpush1.msra.mxu0 0.0
        %216 = vmatprep.subr.mxu0 0.0
        %217 = vmatpush1.msra.mxu0 0.0
        %218 = vmatprep.subr.mxu0 0.0
        %219 = vmatpush1.msra.mxu0 0.0
        %220 = vmatprep.subr.mxu0 0.0
        %221 = vmatpush1.msra.mxu0 0.0
        %222 = vmatprep.subr.mxu0 0.0
        %223 = vmatpush1.msra.mxu0 0.0
        %224 = vmatprep.subr.mxu0 0.0
        %225 = vmatpush1.msra.mxu0 0.0
        %226 = vmatprep.subr.mxu0 0.0
        %227 = vmatpush1.msra.mxu0 0.0
        %228 = vmatprep.subr.mxu0 0.0
        %229 = vmatpush1.msra.mxu0 0.0
        %230 = vmatprep.subr.mxu0 0.0
        %231 = vmatpush1.msra.mxu0 0.0
        %232 = vmatprep.subr.mxu0 0.0
        %233 = vmatpush1.msra.mxu0 0.0
        %234 = vmatprep.subr.mxu0 0.0
        %235 = vmatpush1.msra.mxu0 0.0
        %236 = vmatprep.subr.mxu0 0.0
        %237 = vmatpush1.msra.mxu0 0.0
        %238 = vmatprep.subr.mxu0 0.0
        %239 = vmatpush1.msra.mxu0 0.0
        %240 = vmatprep.subr.mxu0 0.0
        %241 = vmatpush1.msra.mxu0 0.0
        %242 = vmatprep.subr.mxu0 0.0
        %243 = vmatpush1.msra.mxu0 0.0
        %244 = vmatprep.subr.mxu0 0.0
        %245 = vmatpush1.msra.mxu0 0.0
        %246 = vmatprep.subr.mxu0 0.0
        %247 = vmatpush1.msra.mxu0 0.0
        %248 = vmatprep.subr.mxu0 0.0
        %249 = vmatpush1.msra.mxu0 0.0
        %250 = vmatprep.subr.mxu0 0.0
        %251 = vmatpush1.msra.mxu0 0.0
        %252 = vmatprep.subr.mxu0 0.0
        %253 = vmatpush1.msra.mxu0 0.0
        %254 = vmatprep.subr.mxu0 0.0
        %255 = vmatpush1.msra.mxu0 0.0
        %256 = vmatprep.subr.mxu0 0.0
        %257 = vmatpush1.msra.mxu0 0.0
        %258 = vmatprep.mubr.f32.mxu0 0.0
        %259 = vmatmul.mubr.f32.gmra.mrb[0].mxu0 %v189
        %v260 = vpop.f32.mrb[0].mxu0
        %v261 = vadd.f32 0.0, %v260
        %v262 = vpop.f32.mrb[0].mxu0
        %263 = vmatprep.mubr.f32.mxu0 0.0
        %264 = vmatmul.mubr.f32.gmra.mrb[0].mxu0 %v192
        %v265 = vpop.f32.mrb[0].mxu0
        %v266 = vadd.f32 0.0, %v265
        %v267 = vpop.f32.mrb[0].mxu0
        %268 = vdwg.mxu0
        %v270 = vsel %vm187, %v182, 0
        %v273 = vsel %vm187, %v183, 0
        %275 = vmatprep.subr.mxu0 0.0
        %276 = vmatpush1.msra.mxu0 %v177
        %277 = vmatprep.subr.mxu0 0.0
        %278 = vmatpush1.msra.mxu0 %v178
        %279 = vmatprep.subr.mxu0 0.0
        %280 = vmatpush1.msra.mxu0 0.0
        %281 = vmatprep.subr.mxu0 0.0
        %282 = vmatpush1.msra.mxu0 0.0
        %283 = vmatprep.subr.mxu0 0.0
        %284 = vmatpush1.msra.mxu0 0.0
        %285 = vmatprep.subr.mxu0 0.0
        %286 = vmatpush1.msra.mxu0 0.0
        %287 = vmatprep.subr.mxu0 0.0
        %288 = vmatpush1.msra.mxu0 0.0
        %289 = vmatprep.subr.mxu0 0.0
        %290 = vmatpush1.msra.mxu0 0.0
        %291 = vmatprep.subr.mxu0 0.0
        %292 = vmatpush1.msra.mxu0 0.0
        %293 = vmatprep.subr.mxu0 0.0
        %294 = vmatpush1.msra.mxu0 0.0
        %295 = vmatprep.subr.mxu0 0.0
        %296 = vmatpush1.msra.mxu0 0.0
        %297 = vmatprep.subr.mxu0 0.0
        %298 = vmatpush1.msra.mxu0 0.0
        %299 = vmatprep.subr.mxu0 0.0
        %300 = vmatpush1.msra.mxu0 0.0
        %301 = vmatprep.subr.mxu0 0.0
        %302 = vmatpush1.msra.mxu0 0.0
        %303 = vmatprep.subr.mxu0 0.0
        %304 = vmatpush1.msra.mxu0 0.0
        %305 = vmatprep.subr.mxu0 0.0
        %306 = vmatpush1.msra.mxu0 0.0
        %307 = vmatprep.subr.mxu0 0.0
        %308 = vmatpush1.msra.mxu0 0.0
        %309 = vmatprep.subr.mxu0 0.0
        %310 = vmatpush1.msra.mxu0 0.0
        %311 = vmatprep.subr.mxu0 0.0
        %312 = vmatpush1.msra.mxu0 0.0
        %313 = vmatprep.subr.mxu0 0.0
        %314 = vmatpush1.msra.mxu0 0.0
        %315 = vmatprep.subr.mxu0 0.0
        %316 = vmatpush1.msra.mxu0 0.0
        %317 = vmatprep.subr.mxu0 0.0
        %318 = vmatpush1.msra.mxu0 0.0
        %319 = vmatprep.subr.mxu0 0.0
        %320 = vmatpush1.msra.mxu0 0.0
        %321 = vmatprep.subr.mxu0 0.0
        %322 = vmatpush1.msra.mxu0 0.0
        %323 = vmatprep.subr.mxu0 0.0
        %324 = vmatpush1.msra.mxu0 0.0
        %325 = vmatprep.subr.mxu0 0.0
        %326 = vmatpush1.msra.mxu0 0.0
        %327 = vmatprep.subr.mxu0 0.0
        %328 = vmatpush1.msra.mxu0 0.0
        %329 = vmatprep.subr.mxu0 0.0
        %330 = vmatpush1.msra.mxu0 0.0
        %331 = vmatprep.subr.mxu0 0.0
        %332 = vmatpush1.msra.mxu0 0.0
        %333 = vmatprep.subr.mxu0 0.0
        %334 = vmatpush1.msra.mxu0 0.0
        %335 = vmatprep.subr.mxu0 0.0
        %336 = vmatpush1.msra.mxu0 0.0
        %337 = vmatprep.subr.mxu0 0.0
        %338 = vmatpush1.msra.mxu0 0.0
        %339 = vmatprep.mubr.f32.mxu0 0.0
        %340 = vmatmul.mubr.f32.gmra.mrb[0].mxu0 %v270
        %v341 = vpop.f32.mrb[0].mxu0
        %v342 = vadd.f32 %v261, %v341
        %v343 = vpop.f32.mrb[0].mxu0
        %344 = vmatprep.mubr.f32.mxu0 0.0
        %345 = vmatmul.mubr.f32.gmra.mrb[0].mxu0 %v273
        %v346 = vpop.f32.mrb[0].mxu0
        %v347 = vadd.f32 %v266, %v346
        %v348 = vpop.f32.mrb[0].mxu0
        %349 = vdwg.mxu0
        %350 = vst [vmem:[%s176] ss:$2 sm:$0xff] %v342
        %s351 = scalar_lea.vmem %s176, 16 [#allocation7]
        %352 = vst [vmem:[%s351] ss:$2 sm:$0xff] %v347
        %s353 = scalar_lea.vmem %s152, 32 [#allocation2]
        %v354 = vld [vmem:[%s353] sm:$0xff]
        %v355 = vld [vmem:[%s353 + $0x8] sm:$0xff]
        %s356 = scalar_lea.vmem %s152, 48 [#allocation2]
        %v357 = vld [vmem:[%s356] sm:$0xff]
        %v358 = vld [vmem:[%s356 + $0x8] sm:$0xff]
        %v360 = vsel %vm187, %v357, 0
        %v363 = vsel %vm187, %v358, 0
        %365 = vmatprep.subr.mxu0 0.0
        %366 = vmatpush1.msra.mxu0 %v180
        %367 = vmatprep.subr.mxu0 0.0
        %368 = vmatpush1.msra.mxu0 %v181
        %369 = vmatprep.subr.mxu0 0.0
        %370 = vmatpush1.msra.mxu0 0.0
        %371 = vmatprep.subr.mxu0 0.0
        %372 = vmatpush1.msra.mxu0 0.0
        %373 = vmatprep.subr.mxu0 0.0
        %374 = vmatpush1.msra.mxu0 0.0
        %375 = vmatprep.subr.mxu0 0.0
        %376 = vmatpush1.msra.mxu0 0.0
        %377 = vmatprep.subr.mxu0 0.0
        %378 = vmatpush1.msra.mxu0 0.0
        %379 = vmatprep.subr.mxu0 0.0
        %380 = vmatpush1.msra.mxu0 0.0
        %381 = vmatprep.subr.mxu0 0.0
        %382 = vmatpush1.msra.mxu0 0.0
        %383 = vmatprep.subr.mxu0 0.0
        %384 = vmatpush1.msra.mxu0 0.0
        %385 = vmatprep.subr.mxu0 0.0
        %386 = vmatpush1.msra.mxu0 0.0
        %387 = vmatprep.subr.mxu0 0.0
        %388 = vmatpush1.msra.mxu0 0.0
        %389 = vmatprep.subr.mxu0 0.0
        %390 = vmatpush1.msra.mxu0 0.0
        %391 = vmatprep.subr.mxu0 0.0
        %392 = vmatpush1.msra.mxu0 0.0
        %393 = vmatprep.subr.mxu0 0.0
        %394 = vmatpush1.msra.mxu0 0.0
        %395 = vmatprep.subr.mxu0 0.0
        %396 = vmatpush1.msra.mxu0 0.0
        %397 = vmatprep.subr.mxu0 0.0
        %398 = vmatpush1.msra.mxu0 0.0
        %399 = vmatprep.subr.mxu0 0.0
        %400 = vmatpush1.msra.mxu0 0.0
        %401 = vmatprep.subr.mxu0 0.0
        %402 = vmatpush1.msra.mxu0 0.0
        %403 = vmatprep.subr.mxu0 0.0
        %404 = vmatpush1.msra.mxu0 0.0
        %405 = vmatprep.subr.mxu0 0.0
        %406 = vmatpush1.msra.mxu0 0.0
        %407 = vmatprep.subr.mxu0 0.0
        %408 = vmatpush1.msra.mxu0 0.0
        %409 = vmatprep.subr.mxu0 0.0
        %410 = vmatpush1.msra.mxu0 0.0
        %411 = vmatprep.subr.mxu0 0.0
        %412 = vmatpush1.msra.mxu0 0.0
        %413 = vmatprep.subr.mxu0 0.0
        %414 = vmatpush1.msra.mxu0 0.0
        %415 = vmatprep.subr.mxu0 0.0
        %416 = vmatpush1.msra.mxu0 0.0
        %417 = vmatprep.subr.mxu0 0.0
        %418 = vmatpush1.msra.mxu0 0.0
        %419 = vmatprep.subr.mxu0 0.0
        %420 = vmatpush1.msra.mxu0 0.0
        %421 = vmatprep.subr.mxu0 0.0
        %422 = vmatpush1.msra.mxu0 0.0
        %423 = vmatprep.subr.mxu0 0.0
        %424 = vmatpush1.msra.mxu0 0.0
        %425 = vmatprep.subr.mxu0 0.0
        %426 = vmatpush1.msra.mxu0 0.0
        %427 = vmatprep.subr.mxu0 0.0
        %428 = vmatpush1.msra.mxu0 0.0
        %429 = vmatprep.mubr.f32.mxu0 0.0
        %430 = vmatmul.mubr.f32.gmra.mrb[0].mxu0 %v360
        %v431 = vpop.f32.mrb[0].mxu0
        %v432 = vadd.f32 0.0, %v431
        %v433 = vpop.f32.mrb[0].mxu0
        %434 = vmatprep.mubr.f32.mxu0 0.0
        %435 = vmatmul.mubr.f32.gmra.mrb[0].mxu0 %v363
        %v436 = vpop.f32.mrb[0].mxu0
        %v437 = vadd.f32 0.0, %v436
        %v438 = vpop.f32.mrb[0].mxu0
        %439 = vdwg.mxu0
        %v441 = vsel %vm187, %v354, 0
        %v444 = vsel %vm187, %v355, 0
        %446 = vmatprep.subr.mxu0 0.0
        %447 = vmatpush1.msra.mxu0 %v177
        %448 = vmatprep.subr.mxu0 0.0
        %449 = vmatpush1.msra.mxu0 %v178
        %450 = vmatprep.subr.mxu0 0.0
        %451 = vmatpush1.msra.mxu0 0.0
        %452 = vmatprep.subr.mxu0 0.0
        %453 = vmatpush1.msra.mxu0 0.0
        %454 = vmatprep.subr.mxu0 0.0
        %455 = vmatpush1.msra.mxu0 0.0
        %456 = vmatprep.subr.mxu0 0.0
        %457 = vmatpush1.msra.mxu0 0.0
        %458 = vmatprep.subr.mxu0 0.0
        %459 = vmatpush1.msra.mxu0 0.0
        %460 = vmatprep.subr.mxu0 0.0
        %461 = vmatpush1.msra.mxu0 0.0
        %462 = vmatprep.subr.mxu0 0.0
        %463 = vmatpush1.msra.mxu0 0.0
        %464 = vmatprep.subr.mxu0 0.0
        %465 = vmatpush1.msra.mxu0 0.0
        %466 = vmatprep.subr.mxu0 0.0
        %467 = vmatpush1.msra.mxu0 0.0
        %468 = vmatprep.subr.mxu0 0.0
        %469 = vmatpush1.msra.mxu0 0.0
        %470 = vmatprep.subr.mxu0 0.0
        %471 = vmatpush1.msra.mxu0 0.0
        %472 = vmatprep.subr.mxu0 0.0
        %473 = vmatpush1.msra.mxu0 0.0
        %474 = vmatprep.subr.mxu0 0.0
        %475 = vmatpush1.msra.mxu0 0.0
        %476 = vmatprep.subr.mxu0 0.0
        %477 = vmatpush1.msra.mxu0 0.0
        %478 = vmatprep.subr.mxu0 0.0
        %479 = vmatpush1.msra.mxu0 0.0
        %480 = vmatprep.subr.mxu0 0.0
        %481 = vmatpush1.msra.mxu0 0.0
        %482 = vmatprep.subr.mxu0 0.0
        %483 = vmatpush1.msra.mxu0 0.0
        %484 = vmatprep.subr.mxu0 0.0
        %485 = vmatpush1.msra.mxu0 0.0
        %486 = vmatprep.subr.mxu0 0.0
        %487 = vmatpush1.msra.mxu0 0.0
        %488 = vmatprep.subr.mxu0 0.0
        %489 = vmatpush1.msra.mxu0 0.0
        %490 = vmatprep.subr.mxu0 0.0
        %491 = vmatpush1.msra.mxu0 0.0
        %492 = vmatprep.subr.mxu0 0.0
        %493 = vmatpush1.msra.mxu0 0.0
        %494 = vmatprep.subr.mxu0 0.0
        %495 = vmatpush1.msra.mxu0 0.0
        %496 = vmatprep.subr.mxu0 0.0
        %497 = vmatpush1.msra.mxu0 0.0
        %498 = vmatprep.subr.mxu0 0.0
        %499 = vmatpush1.msra.mxu0 0.0
        %500 = vmatprep.subr.mxu0 0.0
        %501 = vmatpush1.msra.mxu0 0.0
        %502 = vmatprep.subr.mxu0 0.0
        %503 = vmatpush1.msra.mxu0 0.0
        %504 = vmatprep.subr.mxu0 0.0
        %505 = vmatpush1.msra.mxu0 0.0
        %506 = vmatprep.subr.mxu0 0.0
        %507 = vmatpush1.msra.mxu0 0.0
        %508 = vmatprep.subr.mxu0 0.0
        %509 = vmatpush1.msra.mxu0 0.0
        %510 = vmatprep.mubr.f32.mxu0 0.0
        %511 = vmatmul.mubr.f32.gmra.mrb[0].mxu0 %v441
        %v512 = vpop.f32.mrb[0].mxu0
        %v513 = vadd.f32 %v432, %v512
        %v514 = vpop.f32.mrb[0].mxu0
        %515 = vmatprep.mubr.f32.mxu0 0.0
        %516 = vmatmul.mubr.f32.gmra.mrb[0].mxu0 %v444
        %v517 = vpop.f32.mrb[0].mxu0
        %v518 = vadd.f32 %v437, %v517
        %v519 = vpop.f32.mrb[0].mxu0
        %520 = vdwg.mxu0
        %s521 = scalar_lea.vmem %s176, 1 [#allocation7]
        %522 = vst [vmem:[%s521] ss:$2 sm:$0xff] %v513
        %s523 = scalar_lea.vmem %s176, 17 [#allocation7]
        %524 = vst [vmem:[%s523] ss:$2 sm:$0xff] %v518
        %s525 = sand.u32 %s75, 1
        %s526 = scalar_lea.sflag [#allocation4], %s525
        %s527 = sand.u32 %s75, 1
        %s528 = smul.addr %s527, 32
        %s529 = scalar_lea.vmem [#allocation7], %s528
        // Predicated region
        $region37: #{tpu_custom_call.1} parent=27 // pred_check
          %p530 = pneg %p85
        $region38: #{tpu_custom_call.1} parent=27 // pred_check_branch
          %532 = sbr.rel (%p530) target = $region40
        $region39: #{tpu_custom_call.1} parent=27 // pred_region
          %s534 = ssub.s32 512, 512
          %535 = vsyncadd %s526, %s534
          %s536 = smul.addr %s20, 4
          %s537 = smul.addr %s536, 128
          %s538 = scalar_lea.hbm %s2, %s537
          %s539 = sshll.u32 %s529, 4
          %s540 = int_to_ptr.vmem [resolvable:$true] %s539
          %545 = dma.vmem_to_hbm [thread:$0]  %s540, 512, %s538, %s526, 128, 128, 8
        $region40: #{tpu_custom_call.1} parent=27 // pred_fallthru
          _
      $region28: #{tpu_custom_call.1} parent=5 // pred_fallthru
        _
      %p546 = scmp.le.s32.totalorder 2, %s15
      // Predicated region
      $region41: #{tpu_custom_call.1} parent=5 // pred_check
        %p547 = pneg %p546
      $region42: #{tpu_custom_call.1} parent=5 // pred_check_branch
        %549 = sbr.rel (%p547) target = $region44
      $region43: #{tpu_custom_call.1} parent=5 // pred_region
        %s550 = ssub.s32 %s15, 2
        // Predicated region
        $region45: #{tpu_custom_call.1} parent=43 // pred_check
          %p551 = pneg %p91
        $region46: #{tpu_custom_call.1} parent=43 // pred_check_branch
          %553 = sbr.rel (%p551) target = $region48
        $region47: #{tpu_custom_call.1} parent=43 // pred_region
          %s554 = sand.u32 %s76, 1
          %s555 = scalar_lea.sflag [#allocation4], %s554
          %s556 = sand.u32 %s76, 1
          %s557 = smul.addr %s556, 32
          %s558 = scalar_lea.vmem [#allocation7], %s557
          %559 = dma.done %s555, 512
        $region48: #{tpu_custom_call.1} parent=43 // pred_fallthru
          _
      $region44: #{tpu_custom_call.1} parent=5 // pred_fallthru
        _
    $region6: #{tpu_custom_call.1} parent=1 // loop_footer
      %s19 = sadd.s32 1, %s15
    $region7: #{tpu_custom_call.1} parent=1 // loop_footer_branch
      %14 = sbr.rel target = $region3
    $region8: #{tpu_custom_call.1} parent=1 // loop_exit
      _
    %560 = vsyncpa [#allocation3], 1
    %s561 = scalar_lea.sflag [#allocation3], 1
    %562 = vsyncpa %s561, 1
    %563 = vsyncpa [#allocation6], 1
    %564 = vsyncpa [#allocation4], 1
    %s565 = scalar_lea.sflag [#allocation4], 1
    %566 = vsyncpa %s565, 1

</llo_original>
